<compile_context>
chip_gen: v7x
topology: tpu7x:2x2x1
jax: 0.10.0
libtpu: 0.0.40
codegen_flags: <defaults>
</compile_context>

<pallas_src>
import functools

import jax
import jax.numpy as jnp
from jax.experimental import pallas as pl
from jax.experimental.pallas import tpu as pltpu


def _round_up(x: int, m: int) -> int:
    return ((x + m - 1) // m) * m


def _decoder_kernel(z_ref, w1_ref, b1_ref, w2_ref, b2_ref, out_ref, *, o_dim):
    # z arrives unpadded in f32; cast to bf16 in-kernel (free VPU work).
    z = z_ref[...].astype(jnp.bfloat16)                       # (TB, L)
    w1 = w1_ref[...]                                          # (L,  Hp) bf16
    b1 = b1_ref[...]                                          # (1,  Hp) f32
    w2 = w2_ref[...]                                          # (Hp, Op) bf16
    b2 = b2_ref[...]                                          # (1,  Op) f32

    # First linear (MXU, bf16 operands, f32 accumulation) + bias + ReLU in f32.
    h = jnp.dot(z, w1, preferred_element_type=jnp.float32) + b1
    h = jnp.maximum(h, 0.0)

    # Second linear (cast activations to bf16 for the MXU, accumulate in f32).
    y = jnp.dot(h.astype(jnp.bfloat16), w2,
                preferred_element_type=jnp.float32) + b2      # (TB, Op)

    if o_dim != y.shape[1]:           # only if O is not a multiple of 128
        y = y[:, :o_dim]
    out_ref[...] = y.astype(out_ref.dtype)


def prepare_decoder_params(w1, b1, w2, b2):
    """One-time weight prep: pad lane dims to 128 and cast MXU operands to bf16.

    Hoisted out of the per-call path so the forward pays no per-call wrapper
    HBM traffic over the (static) weights.
    """
    L, H = w1.shape
    O = w2.shape[1]
    Hp = _round_up(H, 128)
    Op = _round_up(O, 128)
    w1p = jnp.zeros((L, Hp), jnp.bfloat16).at[:, :H].set(w1.astype(jnp.bfloat16))
    w2p = jnp.zeros((Hp, Op), jnp.bfloat16).at[:H, :O].set(w2.astype(jnp.bfloat16))
    b1p = jnp.zeros((1, Hp), jnp.float32).at[0, :H].set(b1.astype(jnp.float32))
    b2p = jnp.zeros((1, Op), jnp.float32).at[0, :O].set(b2.astype(jnp.float32))
    return {"w1p": w1p, "b1p": b1p, "w2p": w2p, "b2p": b2p, "out_dim": O}


def decoder_forward(z, params, *, block_b: int = 512):
    """Fused decoder MLP.  z: (B, L) f32 -> (B, O) f32."""
    B, L = z.shape
    w1p, b1p, w2p, b2p = params["w1p"], params["b1p"], params["w2p"], params["b2p"]
    O = params["out_dim"]
    Hp = w1p.shape[1]
    Op = w2p.shape[1]

    # Batch tile: multiple of 8, capped at block_b, and aiming for >= 2 grid
    # steps so both v7x TensorCores get work.  No batch padding — Pallas masks
    # the partial last block.
    if B <= 8:
        TB = B
    else:
        TB = min(_round_up(block_b, 8), _round_up(-(-B // 2), 8))
    grid = (pl.cdiv(B, TB),)

    kernel = functools.partial(_decoder_kernel, o_dim=O)

    return pl.pallas_call(
        kernel,
        out_shape=jax.ShapeDtypeStruct((B, O), z.dtype),
        grid=grid,
        in_specs=[
            # z tile marches over the batch; last dim is the true (unpadded) L.
            pl.BlockSpec((TB, L), lambda i: (i, 0)),
            # Weights / biases: constant index_map -> VMEM-resident, DMA'd once.
            pl.BlockSpec((L, Hp), lambda i: (0, 0)),
            pl.BlockSpec((1, Hp), lambda i: (0, 0)),
            pl.BlockSpec((Hp, Op), lambda i: (0, 0)),
            pl.BlockSpec((1, Op), lambda i: (0, 0)),
        ],
        out_specs=pl.BlockSpec((TB, O), lambda i: (i, 0)),
        compiler_params=pltpu.CompilerParams(
            dimension_semantics=("parallel",),
        ),
    )(z, w1p, b1p, w2p, b2p)


def decoder_reference(z, w1, b1, w2, b2):
    # Reference with the same bf16 operand rounding / f32 accumulation so the
    # comparison against the kernel is tight.
    zb = z.astype(jnp.bfloat16)
    w1b = w1.astype(jnp.bfloat16)
    w2b = w2.astype(jnp.bfloat16)
    h = jnp.dot(zb, w1b, preferred_element_type=jnp.float32) + b1.reshape(1, -1)
    h = jnp.maximum(h, 0.0)
    y = jnp.dot(h.astype(jnp.bfloat16), w2b,
                preferred_element_type=jnp.float32) + b2.reshape(1, -1)
    return y


if __name__ == "__main__":
    # Small, module-consistent shapes: batch of 8 latents of dim 32 -> 128.
    B, L, H, O = 8, 32, 64, 128

    key = jax.random.PRNGKey(0)
    kz, kw1, kb1, kw2, kb2 = jax.random.split(key, 5)

    z = jax.random.normal(kz, (B, L), dtype=jnp.float32)
    w1 = jax.random.normal(kw1, (L, H), dtype=jnp.float32) * (1.0 / jnp.sqrt(L))
    b1 = jax.random.normal(kb1, (H,), dtype=jnp.float32) * 0.01
    w2 = jax.random.normal(kw2, (H, O), dtype=jnp.float32) * (1.0 / jnp.sqrt(H))
    b2 = jax.random.normal(kb2, (O,), dtype=jnp.float32) * 0.01

    # Weight prep happens once; forwards after that pay no wrapper HBM traffic.
    params = prepare_decoder_params(w1, b1, w2, b2)

    out = jax.block_until_ready(decoder_forward(z, params))
    ref = decoder_reference(z, w1, b1, w2, b2)
    assert out.shape == (B, O)
    assert out.dtype == z.dtype
    assert jnp.allclose(out, ref, atol=1e-2, rtol=1e-2), "mismatch vs reference"

    # Also exercise a multi-step grid with a masked partial last block
    # (B2=40, TB=16 -> 3 grid steps, last block has 8 valid rows).
    B2 = 40
    z2 = jax.random.normal(jax.random.PRNGKey(1), (B2, L), dtype=jnp.float32)
    out2 = jax.block_until_ready(decoder_forward(z2, params, block_b=16))
    ref2 = decoder_reference(z2, w1, b1, w2, b2)
    assert out2.shape == (B2, O)
    assert jnp.allclose(out2, ref2, atol=1e-2, rtol=1e-2), "mismatch (gridded)"

    print("KERNEL_OK")
</pallas_src>

<mosaic_0001>
module attributes {stable_mosaic.version = 11 : i64} {
  func.func @_decoder_kernel(%arg0: i32, %arg1: memref<8x32xf32, #tpu.memory_space<vmem>>, %arg2: memref<32x128xbf16, #tpu.memory_space<vmem>>, %arg3: memref<1x128xf32, #tpu.memory_space<vmem>>, %arg4: memref<128x128xbf16, #tpu.memory_space<vmem>>, %arg5: memref<1x128xf32, #tpu.memory_space<vmem>>, %arg6: memref<8x128xf32, #tpu.memory_space<vmem>>) attributes {dimension_semantics = [#tpu.dimension_semantics<parallel>], iteration_bounds = array<i64: 1>, scalar_prefetch = 0 : i64, scratch_operands = 0 : i64, tpu.core_type = #tpu.core_type<tc>, window_params = [{transform_indices = @transform_0, window_bounds = array<i64: 8, 32>}, {pipeline_mode = #tpu.pipeline_mode<synchronous>, transform_indices = @transform_1, window_bounds = array<i64: 32, 128>}, {pipeline_mode = #tpu.pipeline_mode<synchronous>, transform_indices = @transform_2, window_bounds = array<i64: 1, 128>}, {pipeline_mode = #tpu.pipeline_mode<synchronous>, transform_indices = @transform_3, window_bounds = array<i64: 128, 128>}, {pipeline_mode = #tpu.pipeline_mode<synchronous>, transform_indices = @transform_4, window_bounds = array<i64: 1, 128>}, {transform_indices = @transform_5, window_bounds = array<i64: 8, 128>}]} {
    %c0 = arith.constant 0 : index
    %c0_0 = arith.constant 0 : index
    %0 = vector.load %arg1[%c0, %c0_0] : memref<8x32xf32, #tpu.memory_space<vmem>>, vector<8x32xf32>
    %1 = arith.truncf %0 : vector<8x32xf32> to vector<8x32xbf16>
    %c0_1 = arith.constant 0 : index
    %c0_2 = arith.constant 0 : index
    %2 = vector.load %arg2[%c0_1, %c0_2] : memref<32x128xbf16, #tpu.memory_space<vmem>>, vector<32x128xbf16>
    %c0_3 = arith.constant 0 : index
    %c0_4 = arith.constant 0 : index
    %3 = vector.load %arg3[%c0_3, %c0_4] : memref<1x128xf32, #tpu.memory_space<vmem>>, vector<1x128xf32>
    %c0_5 = arith.constant 0 : index
    %c0_6 = arith.constant 0 : index
    %4 = vector.load %arg4[%c0_5, %c0_6] : memref<128x128xbf16, #tpu.memory_space<vmem>>, vector<128x128xbf16>
    %c0_7 = arith.constant 0 : index
    %c0_8 = arith.constant 0 : index
    %5 = vector.load %arg5[%c0_7, %c0_8] : memref<1x128xf32, #tpu.memory_space<vmem>>, vector<1x128xf32>
    %cst = arith.constant dense<0.000000e+00> : vector<8x128xf32>
    %6 = tpu.matmul %1, %2, %cst {dimension_numbers = #tpu.dot_dimension_numbers<[1], [0], [0], [1], [0, 0, 1, 1], [], []>} : vector<8x32xbf16>, vector<32x128xbf16>, vector<8x128xf32> -> vector<8x128xf32>
    %7 = vector.broadcast %3 : vector<1x128xf32> to vector<8x128xf32>
    %8 = arith.addf %6, %7 : vector<8x128xf32>
    %cst_9 = arith.constant 0.000000e+00 : f32
    %9 = vector.broadcast %cst_9 : f32 to vector<8x128xf32>
    %10 = arith.maximumf %8, %9 : vector<8x128xf32>
    %11 = arith.truncf %10 : vector<8x128xf32> to vector<8x128xbf16>
    %cst_10 = arith.constant dense<0.000000e+00> : vector<8x128xf32>
    %12 = tpu.matmul %11, %4, %cst_10 {dimension_numbers = #tpu.dot_dimension_numbers<[1], [0], [0], [1], [0, 0, 1, 1], [], []>} : vector<8x128xbf16>, vector<128x128xbf16>, vector<8x128xf32> -> vector<8x128xf32>
    %13 = vector.broadcast %5 : vector<1x128xf32> to vector<8x128xf32>
    %14 = arith.addf %12, %13 : vector<8x128xf32>
    %c0_11 = arith.constant 0 : index
    %c0_12 = arith.constant 0 : index
    %15 = vector.load %arg6[%c0_11, %c0_12] : memref<8x128xf32, #tpu.memory_space<vmem>>, vector<8x128xf32>
    tpu.vector_store %arg6[%c0_11, %c0_12], %14 {strides = array<i32>} : memref<8x128xf32, #tpu.memory_space<vmem>>, vector<8x128xf32>,
    return
  }
  func.func @transform_0(%arg0: i32) -> (i32, i32) {
    %c0_i32 = arith.constant 0 : i32
    %c0_i32_0 = arith.constant 0 : i32
    return %arg0, %c0_i32 : i32, i32
  }
  func.func @transform_1(%arg0: i32) -> (i32, i32) {
    %c0_i32 = arith.constant 0 : i32
    %c0_i32_0 = arith.constant 0 : i32
    %c0_i32_1 = arith.constant 0 : i32
    return %c0_i32, %c0_i32_0 : i32, i32
  }
  func.func @transform_2(%arg0: i32) -> (i32, i32) {
    %c0_i32 = arith.constant 0 : i32
    %c0_i32_0 = arith.constant 0 : i32
    %c0_i32_1 = arith.constant 0 : i32
    return %c0_i32, %c0_i32_0 : i32, i32
  }
  func.func @transform_3(%arg0: i32) -> (i32, i32) {
    %c0_i32 = arith.constant 0 : i32
    %c0_i32_0 = arith.constant 0 : i32
    %c0_i32_1 = arith.constant 0 : i32
    return %c0_i32, %c0_i32_0 : i32, i32
  }
  func.func @transform_4(%arg0: i32) -> (i32, i32) {
    %c0_i32 = arith.constant 0 : i32
    %c0_i32_0 = arith.constant 0 : i32
    %c0_i32_1 = arith.constant 0 : i32
    return %c0_i32, %c0_i32_0 : i32, i32
  }
  func.func @transform_5(%arg0: i32) -> (i32, i32) {
    %c0_i32 = arith.constant 0 : i32
    %c0_i32_0 = arith.constant 0 : i32
    return %arg0, %c0_i32 : i32, i32
  }
}

</mosaic_0001>

<llo_original>
// kernel: tpu_custom_call.1
$region0: #{tpu_custom_call.1}
  #allocation0 [shape = 'u32[]', space=smem, size = 0x4, offset = 0x4, fixed_abs, tag = 'smem constant byte address 0x4 - core index']
  #allocation1 [shape = 'u32[144,128]{1,0:T(1,128)}', space=vmem, size = 0x12000, scoped, tag = 'internal scratch']
  %s0 = inlined_call_operand.hbm [shape: f32[8,32], index: 0, kind: input, shape index: {}]
  %s1 = inlined_call_operand.hbm [shape: bf16[32,128], index: 1, kind: input, shape index: {}]
  %s2 = inlined_call_operand.vmem [shape: f32[1,128], index: 2, kind: input, shape index: {}]
  %s3 = inlined_call_operand.hbm [shape: bf16[128,128], index: 3, kind: input, shape index: {}]
  %s4 = inlined_call_operand.vmem [shape: f32[1,128], index: 4, kind: input, shape index: {}]
  %s5 = inlined_call_operand.hbm [shape: f32[8,128], index: 5, kind: output, shape index: {}]
  %s6 = sld [smem:[#allocation0]]
  $region42: #{tpu_custom_call.1} parent=0
    _
  %s8 = ssub.s32 1, %s6
  %s9 = scalar_select 0, %s8, %s6
  $region1: #{tpu_custom_call.1} parent=0
    #allocation2 [shape = 'u8[4096]{0}', space=vmem, size = 0x1000, scoped, tag = 'input window, operand 0, single buffered']
    #allocation3 [shape = 's32[1]{0}', space=sflag, size = 0x4, scoped, tag = 'scoped memory for tpu_custom_call.1']
    #allocation4 [shape = 's32[1]{0}', space=sflag, size = 0x4, scoped, tag = 'scoped memory for tpu_custom_call.1']
    #allocation5 [shape = 'u8[8192]{0}', space=vmem, size = 0x2000, scoped, tag = 'input window, operand 1, single buffered']
    #allocation6 [shape = 's32[1]{0}', space=sflag, size = 0x4, scoped, tag = 'scoped memory for tpu_custom_call.1']
    #allocation7 [shape = 'u8[32768]{0}', space=vmem, size = 0x8000, scoped, tag = 'input window, operand 3, single buffered']
    #allocation8 [shape = 'u8[4096]{0}', space=vmem, size = 0x1000, scoped, tag = 'output window, operand 0, single buffered']
    %10 = vsyncpa [#allocation3], 0
    %11 = vsyncpa [#allocation6], 0
    %12 = vsyncpa [#allocation4], 0
    // Predicated region
    $region2: #{tpu_custom_call.1} parent=1 // pred_check
      _
    $region3: #{tpu_custom_call.1} parent=1 // pred_check_branch
      %14 = sbr.rel (0) target = $region5
    $region4: #{tpu_custom_call.1} parent=1 // pred_region
      %s16 = ssub.s32 128, 128
      %17 = vsyncadd [#allocation3], %s16
      %s19 = sshll.u32 [#allocation2], 4
      %s20 = int_to_ptr.vmem [resolvable:$true] %s19
      %22 = dma.hbm_to_vmem [thread:$0]  %s0, 128, %s20, [#allocation3]
    $region5: #{tpu_custom_call.1} parent=1 // pred_fallthru
      _
    // Predicated region
    $region6: #{tpu_custom_call.1} parent=1 // pred_check
      _
    $region7: #{tpu_custom_call.1} parent=1 // pred_check_branch
      %24 = sbr.rel (0) target = $region9
    $region8: #{tpu_custom_call.1} parent=1 // pred_region
      %s26 = ssub.s32 256, 256
      %27 = vsyncadd [#allocation6], %s26
      %s28 = sshll.u32 [#allocation5], 4
      %s29 = int_to_ptr.vmem [resolvable:$true] %s28
      %34 = dma.hbm_to_vmem [thread:$0]  %s1, 256, %s29, [#allocation6], 64, 64, 4
    $region9: #{tpu_custom_call.1} parent=1 // pred_fallthru
      _
    // Predicated region
    $region10: #{tpu_custom_call.1} parent=1 // pred_check
      _
    $region11: #{tpu_custom_call.1} parent=1 // pred_check_branch
      %36 = sbr.rel (0) target = $region13
    $region12: #{tpu_custom_call.1} parent=1 // pred_region
      _
    $region13: #{tpu_custom_call.1} parent=1 // pred_fallthru
      _
    // Predicated region
    $region14: #{tpu_custom_call.1} parent=1 // pred_check
      _
    $region15: #{tpu_custom_call.1} parent=1 // pred_check_branch
      %38 = sbr.rel (0) target = $region17
    $region16: #{tpu_custom_call.1} parent=1 // pred_region
      %s40 = ssub.s32 1024, 1024
      %41 = vsyncadd [#allocation6], %s40
      %s42 = sshll.u32 [#allocation7], 4
      %s43 = int_to_ptr.vmem [resolvable:$true] %s42
      %48 = dma.hbm_to_vmem [thread:$0]  %s3, 1024, %s43, [#allocation6], 64, 64, 4
    $region17: #{tpu_custom_call.1} parent=1 // pred_fallthru
      _
    // Predicated region
    $region18: #{tpu_custom_call.1} parent=1 // pred_check
      _
    $region19: #{tpu_custom_call.1} parent=1 // pred_check_branch
      %50 = sbr.rel (0) target = $region21
    $region20: #{tpu_custom_call.1} parent=1 // pred_region
      _
    $region21: #{tpu_custom_call.1} parent=1 // pred_fallthru
      _
    // Predicated region
    $region22: #{tpu_custom_call.1} parent=1 // pred_check
      _
    $region23: #{tpu_custom_call.1} parent=1 // pred_check_branch
      %52 = sbr.rel (0) target = $region25
    $region24: #{tpu_custom_call.1} parent=1 // pred_region
      %53 = dma.done [#allocation3], 128
    $region25: #{tpu_custom_call.1} parent=1 // pred_fallthru
      _
    // Predicated region
    $region26: #{tpu_custom_call.1} parent=1 // pred_check
      _
    $region27: #{tpu_custom_call.1} parent=1 // pred_check_branch
      %55 = sbr.rel (0) target = $region29
    $region28: #{tpu_custom_call.1} parent=1 // pred_region
      %56 = dma.done [#allocation6], 256
    $region29: #{tpu_custom_call.1} parent=1 // pred_fallthru
      _
    // Predicated region
    $region30: #{tpu_custom_call.1} parent=1 // pred_check
      _
    $region31: #{tpu_custom_call.1} parent=1 // pred_check_branch
      %58 = sbr.rel (0) target = $region33
    $region32: #{tpu_custom_call.1} parent=1 // pred_region
      %59 = dma.done [#allocation6], 1024
    $region33: #{tpu_custom_call.1} parent=1 // pred_fallthru
      _
    %v61 = vld [vmem:[#allocation2] sm:$0xff]
    %v62 = vpack.c.bf16 %v61, %v61
    %v63 = vld [vmem:[#allocation5] sm:$0xf]
    %v64 = vld [vmem:[#allocation5 + $0x4] sm:$0xf]
    %v65 = vld [vmem:[#allocation5 + $0x8] sm:$0xf]
    %v66 = vld [vmem:[#allocation5 + $0xc] sm:$0xf]
    %v67 = vld [vmem:[%s2] sm:$0x1]
    %v68 = vld [vmem:[#allocation7] sm:$0xf]
    %v69 = vld [vmem:[#allocation7 + $0x4] sm:$0xf]
    %v70 = vld [vmem:[#allocation7 + $0x8] sm:$0xf]
    %v71 = vld [vmem:[#allocation7 + $0xc] sm:$0xf]
    %v72 = vld [vmem:[#allocation7 + $0x10] sm:$0xf]
    %v73 = vld [vmem:[#allocation7 + $0x14] sm:$0xf]
    %v74 = vld [vmem:[#allocation7 + $0x18] sm:$0xf]
    %v75 = vld [vmem:[#allocation7 + $0x1c] sm:$0xf]
    %v76 = vld [vmem:[#allocation7 + $0x20] sm:$0xf]
    %v77 = vld [vmem:[#allocation7 + $0x24] sm:$0xf]
    %v78 = vld [vmem:[#allocation7 + $0x28] sm:$0xf]
    %v79 = vld [vmem:[#allocation7 + $0x2c] sm:$0xf]
    %v80 = vld [vmem:[#allocation7 + $0x30] sm:$0xf]
    %v81 = vld [vmem:[#allocation7 + $0x34] sm:$0xf]
    %v82 = vld [vmem:[#allocation7 + $0x38] sm:$0xf]
    %v83 = vld [vmem:[#allocation7 + $0x3c] sm:$0xf]
    %v84 = vld [vmem:[%s4] sm:$0x1]
    %v86 = vlaneseq
    %v87 = vshrl.u32 %v86, 7
    %v88 = vsub.s32 0, %v87
    %v89 = vrot.slane %v67, %v88
    %v95 = vunpack.c.l.b16 %v63
    %v96 = vunpack.c.l.b16 %v64
    %v97 = vunpack.c.l.b16 %v65
    %v98 = vunpack.c.l.b16 %v66
    %v99 = vpack.c.b16 %v96, %v95
    %v100 = vpack.c.b16 %v98, %v97
    %vm103 = vcmask 261120
    %v105 = vsel %vm103, %v62, 0
    %107 = vmatprep.subr.bf16.mxu0 0
    %108 = vmatpush1.bf16.msra.mxu0 %v99
    %109 = vmatprep.subr.bf16.mxu0 0
    %110 = vmatpush1.bf16.msra.mxu0 %v100
    %111 = vmatprep.subr.bf16.mxu0 0
    %112 = vmatpush1.bf16.msra.mxu0 0
    %113 = vmatprep.subr.bf16.mxu0 0
    %114 = vmatpush1.bf16.msra.mxu0 0
    %115 = vmatprep.subr.bf16.mxu0 0
    %116 = vmatpush1.bf16.msra.mxu0 0
    %117 = vmatprep.subr.bf16.mxu0 0
    %118 = vmatpush1.bf16.msra.mxu0 0
    %119 = vmatprep.subr.bf16.mxu0 0
    %120 = vmatpush1.bf16.msra.mxu0 0
    %121 = vmatprep.subr.bf16.mxu0 0
    %122 = vmatpush1.bf16.msra.mxu0 0
    %123 = vmatprep.subr.bf16.mxu0 0
    %124 = vmatpush1.bf16.msra.mxu0 0
    %125 = vmatprep.subr.bf16.mxu0 0
    %126 = vmatpush1.bf16.msra.mxu0 0
    %127 = vmatprep.subr.bf16.mxu0 0
    %128 = vmatpush1.bf16.msra.mxu0 0
    %129 = vmatprep.subr.bf16.mxu0 0
    %130 = vmatpush1.bf16.msra.mxu0 0
    %131 = vmatprep.subr.bf16.mxu0 0
    %132 = vmatpush1.bf16.msra.mxu0 0
    %133 = vmatprep.subr.bf16.mxu0 0
    %134 = vmatpush1.bf16.msra.mxu0 0
    %135 = vmatprep.subr.bf16.mxu0 0
    %136 = vmatpush1.bf16.msra.mxu0 0
    %137 = vmatprep.subr.bf16.mxu0 0
    %138 = vmatpush1.bf16.msra.mxu0 0
    %139 = vmatprep.mubr.bf16.mxu0 0
    %140 = vmatmul.mubr.bf16.gmra.mrb[0].mxu0 %v105
    %v141 = vpop.f32.mrb[0].mxu0
    %v142 = vadd.f32 %v89, %v141
    %v143 = vpop.f32.mrb[0].mxu0
    %v144 = vpop.f32.mrb[0].mxu0
    %v145 = vpop.f32.mrb[0].mxu0
    %146 = vdwg.mxu0
    %v147 = vmax.f32 %v142, 0.0
    %v148 = vpack.c.bf16 %v147, %v147
    %v150 = vlaneseq
    %v151 = vshrl.u32 %v150, 7
    %v152 = vsub.s32 0, %v151
    %v153 = vrot.slane %v84, %v152
    %v171 = vunpack.c.l.b16 %v68
    %v172 = vunpack.c.l.b16 %v69
    %v173 = vunpack.c.l.b16 %v70
    %v174 = vunpack.c.l.b16 %v71
    %v175 = vunpack.c.l.b16 %v72
    %v176 = vunpack.c.l.b16 %v73
    %v177 = vunpack.c.l.b16 %v74
    %v178 = vunpack.c.l.b16 %v75
    %v179 = vunpack.c.l.b16 %v76
    %v180 = vunpack.c.l.b16 %v77
    %v181 = vunpack.c.l.b16 %v78
    %v182 = vunpack.c.l.b16 %v79
    %v183 = vunpack.c.l.b16 %v80
    %v184 = vunpack.c.l.b16 %v81
    %v185 = vunpack.c.l.b16 %v82
    %v186 = vunpack.c.l.b16 %v83
    %v187 = vpack.c.b16 %v172, %v171
    %v188 = vpack.c.b16 %v174, %v173
    %v189 = vpack.c.b16 %v176, %v175
    %v190 = vpack.c.b16 %v178, %v177
    %v191 = vpack.c.b16 %v180, %v179
    %v192 = vpack.c.b16 %v182, %v181
    %v193 = vpack.c.b16 %v184, %v183
    %v194 = vpack.c.b16 %v186, %v185
    %203 = vmatprep.subr.bf16.mxu0 0
    %204 = vmatpush1.bf16.msra.mxu0 %v187
    %205 = vmatprep.subr.bf16.mxu0 0
    %206 = vmatpush1.bf16.msra.mxu0 %v188
    %207 = vmatprep.subr.bf16.mxu0 0
    %208 = vmatpush1.bf16.msra.mxu0 %v189
    %209 = vmatprep.subr.bf16.mxu0 0
    %210 = vmatpush1.bf16.msra.mxu0 %v190
    %211 = vmatprep.subr.bf16.mxu0 0
    %212 = vmatpush1.bf16.msra.mxu0 %v191
    %213 = vmatprep.subr.bf16.mxu0 0
    %214 = vmatpush1.bf16.msra.mxu0 %v192
    %215 = vmatprep.subr.bf16.mxu0 0
    %216 = vmatpush1.bf16.msra.mxu0 %v193
    %217 = vmatprep.subr.bf16.mxu0 0
    %218 = vmatpush1.bf16.msra.mxu0 %v194
    %219 = vmatprep.subr.bf16.mxu0 0
    %220 = vmatpush1.bf16.msra.mxu0 0
    %221 = vmatprep.subr.bf16.mxu0 0
    %222 = vmatpush1.bf16.msra.mxu0 0
    %223 = vmatprep.subr.bf16.mxu0 0
    %224 = vmatpush1.bf16.msra.mxu0 0
    %225 = vmatprep.subr.bf16.mxu0 0
    %226 = vmatpush1.bf16.msra.mxu0 0
    %227 = vmatprep.subr.bf16.mxu0 0
    %228 = vmatpush1.bf16.msra.mxu0 0
    %229 = vmatprep.subr.bf16.mxu0 0
    %230 = vmatpush1.bf16.msra.mxu0 0
    %231 = vmatprep.subr.bf16.mxu0 0
    %232 = vmatpush1.bf16.msra.mxu0 0
    %233 = vmatprep.subr.bf16.mxu0 0
    %234 = vmatpush1.bf16.msra.mxu0 0
    %235 = vmatprep.mubr.bf16.mxu0 0
    %236 = vmatmul.mubr.bf16.gmra.mrb[0].mxu0 %v148
    %v237 = vpop.f32.mrb[0].mxu0
    %v238 = vadd.f32 %v153, %v237
    %v239 = vpop.f32.mrb[0].mxu0
    %v240 = vpop.f32.mrb[0].mxu0
    %v241 = vpop.f32.mrb[0].mxu0
    %242 = vdwg.mxu0
    %243 = vst [vmem:[#allocation8] sm:$0xff] %v238
    // Predicated region
    $region34: #{tpu_custom_call.1} parent=1 // pred_check
      _
    $region35: #{tpu_custom_call.1} parent=1 // pred_check_branch
      %245 = sbr.rel (0) target = $region37
    $region36: #{tpu_custom_call.1} parent=1 // pred_region
      %s247 = ssub.s32 128, 128
      %248 = vsyncadd [#allocation4], %s247
      %s250 = sshll.u32 [#allocation8], 4
      %s251 = int_to_ptr.vmem [resolvable:$true] %s250
      %253 = dma.vmem_to_hbm [thread:$0]  %s251, 128, %s5, [#allocation4]
    $region37: #{tpu_custom_call.1} parent=1 // pred_fallthru
      _
    // Predicated region
    $region38: #{tpu_custom_call.1} parent=1 // pred_check
      _
    $region39: #{tpu_custom_call.1} parent=1 // pred_check_branch
      %255 = sbr.rel (0) target = $region41
    $region40: #{tpu_custom_call.1} parent=1 // pred_region
      %256 = dma.done [#allocation4], 128
    $region41: #{tpu_custom_call.1} parent=1 // pred_fallthru
      _
    %257 = vsyncpa [#allocation3], 1
    %258 = vsyncpa [#allocation6], 1
    %259 = vsyncpa [#allocation4], 1

</llo_original>
